<compile_context>
chip_gen: v5e
topology: v5e:2x2
jax: 0.10.0
libtpu: 0.0.40
codegen_flags: <defaults>
</compile_context>

<pallas_src>
import functools

import jax
import jax.numpy as jnp
from jax.experimental import pallas as pl
from jax.experimental.pallas import tpu as pltpu


def _round_up(x, m):
    return ((x + m - 1) // m) * m


def _pick_tile_hw(C, HW, *, target_bytes=1 << 20, min_hw=512, max_hw=8192):
    """Lane-dense spatial tile sized from C so each input tile is ~1 MiB (f32)."""
    cand = _round_up(max(1, target_bytes // (4 * C)), 128)
    cand = max(min_hw, min(max_hw, cand))
    if cand >= HW:
        # Whole spatial row fits in one block: use the exact dim (block == full
        # array dim is always layout-legal, and no ragged tail / mask needed).
        return HW
    return cand


# ---------------------------------------------------------------------------
# Fused LPIPS per-layer head:
#   res = spatial_average( NetLinLayer( (normalize(f0) - normalize(f1))^2 ) )
# ---------------------------------------------------------------------------
def _lpips_head_kernel(x0_ref, x1_ref, w_ref, o_ref, *,
                       hw, t_hw, tiles_per_split, eps):
    s = pl.program_id(2)

    @pl.when(s == 0)
    def _init():
        o_ref[...] = jnp.zeros_like(o_ref)

    # Channels on sublanes, spatial on lanes. Cast AFTER the load so bf16
    # trunk features are DMA'd as bf16 (half the HBM traffic of an f32 copy).
    x0 = x0_ref[0].astype(jnp.float32)                  # (C, t_hw)
    x1 = x1_ref[0].astype(jnp.float32)
    w = w_ref[...]                                      # (C, 1), pre-scaled by 1/HW

    # normalize_tensor: x / (sqrt(sum_c x^2) + eps); reduction over sublanes.
    inv0 = 1.0 / (jnp.sqrt(jnp.sum(x0 * x0, axis=0, keepdims=True)) + eps)
    inv1 = 1.0 / (jnp.sqrt(jnp.sum(x1 * x1, axis=0, keepdims=True)) + eps)
    d = x0 * inv0 - x1 * inv1
    d = d * d                                           # (C, t_hw)

    # Ragged last spatial tile: zero lanes past HW (stale DMA tail). Only
    # compiled in when HW % t_hw != 0 (static).
    if hw % t_hw != 0:
        tile_idx = pl.program_id(1) * tiles_per_split + s
        valid = hw - tile_idx * t_hw
        lane = jax.lax.broadcasted_iota(jnp.int32, (1, t_hw), 1)
        d = jnp.where(lane < valid, d, 0.0)

    # Lane-reduce each channel first (XLU), then the tiny weighted channel sum:
    # avoids broadcasting w to (C, t_hw) and C*t_hw VPU multiplies per step.
    d_col = jnp.sum(d, axis=1, keepdims=True)           # (C, 1)
    o_ref[0] += jnp.sum(w * d_col, axis=0, keepdims=True)   # (1, 1)


def lpips_layer_head(feat0, feat1, weight, *, eps=1e-10, tile_hw=None):
    """spatial_average(lin((normalize(feat0) - normalize(feat1))**2)).

    feat0, feat1: (N, C, H, W) trunk features of one LPIPS stage (f32 or bf16).
    weight:       1x1-conv weight, chn_out=1; any of (C,), (1, C), (1, C, 1, 1).
    returns:      (N, 1, 1, 1) float32.
    """
    N, C, H, W = feat0.shape
    assert feat1.shape == feat0.shape
    HW = H * W

    # Free NCHW view as (N, C, HW); no dtype cast, no padding (no HBM copies).
    x0 = feat0.reshape(N, C, HW)
    x1 = feat1.reshape(N, C, HW)

    w = jnp.asarray(weight, jnp.float32).reshape(-1)
    assert w.shape[0] == C, "NetLinLayer inside LPIPS has chn_out=1"
    w = (w / HW).reshape(C, 1)          # fold spatial-mean 1/HW into the weight

    t_hw = tile_hw if tile_hw is not None else _pick_tile_hw(C, HW)
    if t_hw != HW:
        t_hw = _round_up(t_hw, 128)
    num_tiles = -(-HW // t_hw)

    # Two parallel halves of the spatial reduction (own output blocks, summed
    # in the wrapper) so a 2-TC chip (v7x) stays busy even at small N.
    n_split = 2 if (num_tiles >= 2 and num_tiles % 2 == 0) else 1
    tiles_per_split = num_tiles // n_split

    kernel = functools.partial(_lpips_head_kernel, hw=HW, t_hw=t_hw,
                               tiles_per_split=tiles_per_split, eps=eps)

    def in_map(n, p, s, _tps=tiles_per_split):
        return (n, 0, p * _tps + s)

    itemsize = jnp.dtype(feat0.dtype).itemsize
    out = pl.pallas_call(
        kernel,
        out_shape=jax.ShapeDtypeStruct((N, n_split, 1), jnp.float32),
        grid=(N, n_split, tiles_per_split),
        in_specs=[
            pl.BlockSpec((1, C, t_hw), in_map),
            pl.BlockSpec((1, C, t_hw), in_map),
            pl.BlockSpec((C, 1), lambda n, p, s: (0, 0)),
        ],
        out_specs=pl.BlockSpec((1, 1, 1), lambda n, p, s: (n, p, 0)),
        compiler_params=pltpu.CompilerParams(
            dimension_semantics=("parallel", "parallel", "arbitrary"),
            vmem_limit_bytes=32 * 1024 * 1024,
        ),
        cost_estimate=pl.CostEstimate(
            flops=int(9 * N * C * HW),
            transcendentals=int(4 * N * HW),
            bytes_accessed=int(2 * N * C * HW * itemsize + N * n_split * 4),
        ),
    )(x0, x1, w)

    return jnp.sum(out, axis=1).reshape(N, 1, 1, 1)


# ---------------------------------------------------------------------------
# Standalone NetLinLayer (1x1 conv, chn_out=1, no bias), NCHW-native:
#   y[n, 0, h, w] = sum_c weight[c] * x[n, c, h, w]
# ---------------------------------------------------------------------------
def _netlin_kernel(x_ref, w_ref, o_ref):
    x = x_ref[0].astype(jnp.float32)                     # (C, t_hw)
    w = w_ref[...]                                       # (C, 1)
    # OOB lanes of a ragged last block produce garbage here, but the partial
    # output store drops them, so no mask is needed.
    o_ref[0] = jnp.sum(w * x, axis=0, keepdims=True)     # (1, t_hw), lane-dense


def netlin_layer(x_nchw, weight, *, tile_hw=None):
    N, C, H, W = x_nchw.shape
    HW = H * W
    w = jnp.asarray(weight, jnp.float32).reshape(-1)
    assert w.shape[0] == C, "NetLinLayer with chn_out=1"

    x = x_nchw.reshape(N, C, HW)        # free view; no cast, no pad, no slice

    t_hw = tile_hw if tile_hw is not None else _pick_tile_hw(C, HW)
    if t_hw != HW:
        t_hw = _round_up(t_hw, 128)
    num_tiles = -(-HW // t_hw)

    itemsize = jnp.dtype(x_nchw.dtype).itemsize
    out = pl.pallas_call(
        _netlin_kernel,
        out_shape=jax.ShapeDtypeStruct((N, 1, HW), jnp.float32),
        grid=(N, num_tiles),
        in_specs=[
            pl.BlockSpec((1, C, t_hw), lambda n, s: (n, 0, s)),
            pl.BlockSpec((C, 1), lambda n, s: (0, 0)),
        ],
        out_specs=pl.BlockSpec((1, 1, t_hw), lambda n, s: (n, 0, s)),
        compiler_params=pltpu.CompilerParams(
            dimension_semantics=("parallel", "parallel"),
            vmem_limit_bytes=32 * 1024 * 1024,
        ),
        cost_estimate=pl.CostEstimate(
            flops=int(2 * N * C * HW),
            transcendentals=0,
            bytes_accessed=int(N * C * HW * itemsize + N * HW * 4),
        ),
    )(x, w.reshape(C, 1))

    return out.reshape(N, 1, H, W)


if __name__ == "__main__":
    key = jax.random.PRNGKey(0)
    ks = jax.random.split(key, 12)
    N = 2

    # ---- pure-JAX references ----
    def ref_head(f0, f1, w, eps=1e-10):
        f0 = f0.astype(jnp.float32)
        f1 = f1.astype(jnp.float32)
        n0 = f0 / (jnp.sqrt(jnp.sum(f0 * f0, axis=1, keepdims=True)) + eps)
        n1 = f1 / (jnp.sqrt(jnp.sum(f1 * f1, axis=1, keepdims=True)) + eps)
        d = (n0 - n1) ** 2
        lin = jnp.einsum("nchw,c->nhw", d,
                         jnp.asarray(w, jnp.float32).reshape(-1))[:, None]
        return jnp.mean(lin, axis=(2, 3), keepdims=True)

    def ref_netlin(x, w):
        return jnp.einsum("nchw,c->nhw", x.astype(jnp.float32),
                          jnp.asarray(w, jnp.float32).reshape(-1))[:, None]

    # Stage A: C=4, 16x16  (single full-width spatial block)
    f0_a = jax.random.normal(ks[0], (N, 4, 16, 16), dtype=jnp.float32)
    f1_a = jax.random.normal(ks[1], (N, 4, 16, 16), dtype=jnp.float32)
    w_a = jax.random.normal(ks[2], (1, 4, 1, 1), dtype=jnp.float32) * 0.1

    # Stage B: C=8, 8x8   (HW=64 < 128 -> exact full-dim block)
    f0_b = jax.random.normal(ks[3], (N, 8, 8, 8), dtype=jnp.float32)
    f1_b = jax.random.normal(ks[4], (N, 8, 8, 8), dtype=jnp.float32)
    w_b = jax.random.normal(ks[5], (1, 8, 1, 1), dtype=jnp.float32) * 0.1

    # Stage C: C=8, 13x13 with forced tile_hw=128 (2 tiles -> 2-way split + ragged mask)
    f0_c = jax.random.normal(ks[6], (N, 8, 13, 13), dtype=jnp.float32)
    f1_c = jax.random.normal(ks[7], (N, 8, 13, 13), dtype=jnp.float32)
    w_c = jax.random.normal(ks[8], (1, 8, 1, 1), dtype=jnp.float32) * 0.1

    # Stage D: C=8, 20x20 with forced tile_hw=128 (4 tiles -> split + accumulation + mask)
    f0_d = jax.random.normal(ks[9], (N, 8, 20, 20), dtype=jnp.float32)
    f1_d = jax.random.normal(ks[10], (N, 8, 20, 20), dtype=jnp.float32)
    w_d = w_b

    r_a = lpips_layer_head(f0_a, f1_a, w_a)
    r_b = lpips_layer_head(f0_b, f1_b, w_b)
    r_c = lpips_layer_head(f0_c, f1_c, w_c, tile_hw=128)
    r_d = lpips_layer_head(f0_d, f1_d, w_d, tile_hw=128)
    # LPIPS "val" is the sum over layers.
    val = jax.block_until_ready(r_a + r_b + r_c + r_d)

    # bf16 trunk features: no wrapper upcast, cast happens in-kernel.
    r_bf16 = jax.block_until_ready(
        lpips_layer_head(f0_b.astype(jnp.bfloat16), f1_b.astype(jnp.bfloat16), w_b))

    # Standalone NetLinLayer (spatial output kept, as in spatial=True path).
    x = jax.random.normal(ks[11], (N, 4, 16, 16), dtype=jnp.float32)
    y = jax.block_until_ready(netlin_layer(x, w_a))
    y_rag = jax.block_until_ready(netlin_layer(f0_c, w_c, tile_hw=128))

    r_a_ref = ref_head(f0_a, f1_a, w_a)
    r_b_ref = ref_head(f0_b, f1_b, w_b)
    r_c_ref = ref_head(f0_c, f1_c, w_c)
    r_d_ref = ref_head(f0_d, f1_d, w_d)
    r_bf16_ref = ref_head(f0_b.astype(jnp.bfloat16), f1_b.astype(jnp.bfloat16), w_b)
    y_ref = ref_netlin(x, w_a)
    y_rag_ref = ref_netlin(f0_c, w_c)

    assert val.shape == (N, 1, 1, 1)
    assert y.shape == (N, 1, 16, 16)
    assert y_rag.shape == (N, 1, 13, 13)
    assert jnp.allclose(r_a, r_a_ref, atol=1e-5, rtol=1e-5)
    assert jnp.allclose(r_b, r_b_ref, atol=1e-5, rtol=1e-5)
    assert jnp.allclose(r_c, r_c_ref, atol=1e-5, rtol=1e-5)
    assert jnp.allclose(r_d, r_d_ref, atol=1e-5, rtol=1e-5)
    assert jnp.allclose(val, r_a_ref + r_b_ref + r_c_ref + r_d_ref,
                        atol=1e-5, rtol=1e-5)
    assert jnp.allclose(r_bf16, r_bf16_ref, atol=1e-4, rtol=1e-4)
    assert jnp.allclose(y, y_ref, atol=1e-5, rtol=1e-5)
    assert jnp.allclose(y_rag, y_rag_ref, atol=1e-5, rtol=1e-5)

    print("KERNEL_OK")
</pallas_src>

<mosaic_0001>
module attributes {stable_mosaic.version = 11 : i64} {
  func.func @_lpips_head_kernel(%arg0: i32, %arg1: i32, %arg2: i32, %arg3: memref<1x4x256xf32, #tpu.memory_space<vmem>>, %arg4: memref<1x4x256xf32, #tpu.memory_space<vmem>>, %arg5: memref<4x1xf32, #tpu.memory_space<vmem>>, %arg6: memref<1x1x1xf32, #tpu.memory_space<vmem>>) attributes {dimension_semantics = [#tpu.dimension_semantics<parallel>, #tpu.dimension_semantics<parallel>, #tpu.dimension_semantics<arbitrary>], iteration_bounds = array<i64: 2, 1, 1>, scalar_prefetch = 0 : i64, scratch_operands = 0 : i64, tpu.core_type = #tpu.core_type<tc>, window_params = [{transform_indices = @transform_0, window_bounds = array<i64: 1, 4, 256>}, {transform_indices = @transform_1, window_bounds = array<i64: 1, 4, 256>}, {pipeline_mode = #tpu.pipeline_mode<synchronous>, transform_indices = @transform_2, window_bounds = array<i64: 4, 1>}, {transform_indices = @transform_3, window_bounds = array<i64: 1, 1, 1>}]} {
    %c0_i32 = arith.constant 0 : i32
    %0 = arith.cmpi eq, %arg2, %c0_i32 : i32
    %1 = arith.extui %0 : i1 to i32
    %c0_i32_0 = arith.constant 0 : i32
    %2 = arith.cmpi ne, %1, %c0_i32_0 : i32
    scf.if %2 {
      %cst_21 = arith.constant 0.000000e+00 : f32
      %41 = vector.broadcast %cst_21 : f32 to vector<1x1x1xf32>
      %c0_22 = arith.constant 0 : index
      %c0_23 = arith.constant 0 : index
      %c0_24 = arith.constant 0 : index
      %42 = vector.load %arg6[%c0_22, %c0_23, %c0_24] : memref<1x1x1xf32, #tpu.memory_space<vmem>>, vector<1x1x1xf32>
      tpu.vector_store %arg6[%c0_22, %c0_23, %c0_24], %41 {strides = array<i32>} : memref<1x1x1xf32, #tpu.memory_space<vmem>>, vector<1x1x1xf32>,
    } else {
    }
    %c0 = arith.constant 0 : index
    %c0_1 = arith.constant 0 : index
    %c0_2 = arith.constant 0 : index
    %3 = vector.load %arg3[%c0, %c0_1, %c0_2] : memref<1x4x256xf32, #tpu.memory_space<vmem>>, vector<1x4x256xf32>
    %4 = vector.shape_cast %3 : vector<1x4x256xf32> to vector<4x256xf32>
    %c0_3 = arith.constant 0 : index
    %c0_4 = arith.constant 0 : index
    %c0_5 = arith.constant 0 : index
    %5 = vector.load %arg4[%c0_3, %c0_4, %c0_5] : memref<1x4x256xf32, #tpu.memory_space<vmem>>, vector<1x4x256xf32>
    %6 = vector.shape_cast %5 : vector<1x4x256xf32> to vector<4x256xf32>
    %c0_6 = arith.constant 0 : index
    %c0_7 = arith.constant 0 : index
    %7 = vector.load %arg5[%c0_6, %c0_7] : memref<4x1xf32, #tpu.memory_space<vmem>>, vector<4x1xf32>
    %8 = arith.mulf %4, %4 : vector<4x256xf32>
    %cst = arith.constant dense<0.000000e+00> : vector<256xf32>
    %9 = vector.multi_reduction <add>, %8, %cst [0] : vector<4x256xf32> to vector<256xf32>
    %10 = vector.shape_cast %9 : vector<256xf32> to vector<1x256xf32>
    %11 = math.sqrt %10 : vector<1x256xf32>
    %cst_8 = arith.constant 1.000000e-10 : f32
    %12 = vector.broadcast %cst_8 : f32 to vector<1x256xf32>
    %13 = arith.addf %11, %12 : vector<1x256xf32>
    %cst_9 = arith.constant 1.000000e+00 : f32
    %14 = vector.broadcast %cst_9 : f32 to vector<1x256xf32>
    %15 = arith.divf %14, %13 : vector<1x256xf32>
    %16 = arith.mulf %6, %6 : vector<4x256xf32>
    %cst_10 = arith.constant dense<0.000000e+00> : vector<256xf32>
    %17 = vector.multi_reduction <add>, %16, %cst_10 [0] : vector<4x256xf32> to vector<256xf32>
    %18 = vector.shape_cast %17 : vector<256xf32> to vector<1x256xf32>
    %19 = math.sqrt %18 : vector<1x256xf32>
    %cst_11 = arith.constant 1.000000e-10 : f32
    %20 = vector.broadcast %cst_11 : f32 to vector<1x256xf32>
    %21 = arith.addf %19, %20 : vector<1x256xf32>
    %cst_12 = arith.constant 1.000000e+00 : f32
    %22 = vector.broadcast %cst_12 : f32 to vector<1x256xf32>
    %23 = arith.divf %22, %21 : vector<1x256xf32>
    %24 = vector.broadcast %15 : vector<1x256xf32> to vector<4x256xf32>
    %25 = arith.mulf %4, %24 : vector<4x256xf32>
    %26 = vector.broadcast %23 : vector<1x256xf32> to vector<4x256xf32>
    %27 = arith.mulf %6, %26 : vector<4x256xf32>
    %28 = arith.subf %25, %27 : vector<4x256xf32>
    %29 = arith.mulf %28, %28 : vector<4x256xf32>
    %cst_13 = arith.constant dense<0.000000e+00> : vector<4xf32>
    %30 = vector.multi_reduction <add>, %29, %cst_13 [1] : vector<4x256xf32> to vector<4xf32>
    %31 = vector.shape_cast %30 : vector<4xf32> to vector<4x1xf32>
    %c0_14 = arith.constant 0 : index
    %c0_15 = arith.constant 0 : index
    %c0_16 = arith.constant 0 : index
    %32 = vector.load %arg6[%c0_14, %c0_15, %c0_16] : memref<1x1x1xf32, #tpu.memory_space<vmem>>, vector<1x1x1xf32>
    %33 = vector.shape_cast %32 : vector<1x1x1xf32> to vector<1x1xf32>
    %34 = arith.mulf %7, %31 : vector<4x1xf32>
    %cst_17 = arith.constant dense<0.000000e+00> : vector<1xf32>
    %35 = vector.multi_reduction <add>, %34, %cst_17 [0] : vector<4x1xf32> to vector<1xf32>
    %36 = vector.shape_cast %35 : vector<1xf32> to vector<1x1xf32>
    %37 = arith.addf %33, %36 : vector<1x1xf32>
    %c0_18 = arith.constant 0 : index
    %c0_19 = arith.constant 0 : index
    %c0_20 = arith.constant 0 : index
    %38 = vector.load %arg6[%c0_18, %c0_19, %c0_20] : memref<1x1x1xf32, #tpu.memory_space<vmem>>, vector<1x1x1xf32>
    %39 = vector.shape_cast %38 : vector<1x1x1xf32> to vector<1x1xf32>
    %40 = vector.shape_cast %37 : vector<1x1xf32> to vector<1x1x1xf32>
    tpu.vector_store %arg6[%c0_18, %c0_19, %c0_20], %40 {strides = array<i32>} : memref<1x1x1xf32, #tpu.memory_space<vmem>>, vector<1x1x1xf32>,
    return
  }
  func.func @transform_0(%arg0: i32, %arg1: i32, %arg2: i32) -> (i32, i32, i32) {
    %c1_i32 = arith.constant 1 : i32
    %0 = arith.muli %arg1, %c1_i32 : i32
    %1 = arith.addi %0, %arg2 : i32
    %c0_i32 = arith.constant 0 : i32
    %c0_i32_0 = arith.constant 0 : i32
    return %arg0, %c0_i32, %1 : i32, i32, i32
  }
  func.func @transform_1(%arg0: i32, %arg1: i32, %arg2: i32) -> (i32, i32, i32) {
    %c1_i32 = arith.constant 1 : i32
    %0 = arith.muli %arg1, %c1_i32 : i32
    %1 = arith.addi %0, %arg2 : i32
    %c0_i32 = arith.constant 0 : i32
    %c0_i32_0 = arith.constant 0 : i32
    return %arg0, %c0_i32, %1 : i32, i32, i32
  }
  func.func @transform_2(%arg0: i32, %arg1: i32, %arg2: i32) -> (i32, i32) {
    %c0_i32 = arith.constant 0 : i32
    %c0_i32_0 = arith.constant 0 : i32
    %c0_i32_1 = arith.constant 0 : i32
    return %c0_i32, %c0_i32_0 : i32, i32
  }
  func.func @transform_3(%arg0: i32, %arg1: i32, %arg2: i32) -> (i32, i32, i32) {
    %c0_i32 = arith.constant 0 : i32
    %c0_i32_0 = arith.constant 0 : i32
    return %arg0, %arg1, %c0_i32 : i32, i32, i32
  }
}

</mosaic_0001>

<llo_original>
// kernel: tpu_custom_call.1
$region0: #{tpu_custom_call.1}
  #allocation0 [shape = 'u32[]', space=smem, size = 0x4, offset = 0x4, fixed_abs, tag = 'smem constant byte address 0x4 - core index']
  #allocation1 [shape = 'u32[72,128]{1,0:T(1,128)}', space=vmem, size = 0x9000, scoped, tag = 'internal scratch']
  %s0 = inlined_call_operand.hbm [shape: f32[2,4,256], index: 0, kind: input, shape index: {}]
  %s1 = inlined_call_operand.hbm [shape: f32[2,4,256], index: 1, kind: input, shape index: {}]
  %s2 = inlined_call_operand.vmem [shape: f32[4,1], index: 2, kind: input, shape index: {}]
  %s3 = inlined_call_operand.vmem [shape: f32[2,1,1], index: 3, kind: output, shape index: {}]
  %s4 = sld [smem:[#allocation0]]
  $region57: #{tpu_custom_call.1} parent=0
    _
  %s6 = ssub.s32 1, %s4
  %s7 = scalar_select 0, %s6, %s4
  $region1: #{tpu_custom_call.1} parent=0
    #allocation2 [shape = 'u8[8192]{0}', space=vmem, size = 0x2000, scoped, tag = 'input window, operand 0']
    #allocation3 [shape = 's32[2]{0}', space=sflag, size = 0x8, scoped, tag = 'scoped memory for tpu_custom_call.1']
    #allocation4 [shape = 'u8[8192]{0}', space=vmem, size = 0x2000, scoped, tag = 'input window, operand 1']
    #allocation5 [shape = 's32[2]{0}', space=sflag, size = 0x8, scoped, tag = 'scoped memory for tpu_custom_call.1']
    %8 = vsyncpa [#allocation3], 0
    %s9 = scalar_lea.sflag [#allocation3], 1
    %10 = vsyncpa %s9, 0
    %11 = vsyncpa [#allocation5], 0
    %s12 = scalar_lea.sflag [#allocation5], 1
    %13 = vsyncpa %s12, 0
    loop: start=0, step=1, limit=4
    $region2: #{tpu_custom_call.1} parent=1 // loop_pre_header
      _
    $region3: #{tpu_custom_call.1} parent=1 // loop_header
      %s15 = sphi 0, %s19
      %p16 = scmp.ge.s32.totalorder %s15, 4
      %s22 = sphi 0, %s41
      %s23 = sphi 0, %s37
      %s24 = sphi 0, %s33
      %s25 = sphi 0, %s22
      %s26 = sphi 0, %s23
      %s27 = sphi 0, %s24
      %s28 = sphi 0, %s25
      %s29 = sphi 0, %s26
      %s30 = sphi 0, %s27
      %s48 = sphi 0, %s50
      %s51 = sphi 0, %s48
      %s52 = sphi 0, %s51
      %s68 = sphi 0, %s52
      %s78 = sphi 0, %s80
      %s81 = sphi 0, %s78
      %s82 = sphi 0, %s81
      %s98 = sphi 0, %s82
      %s102 = sphi 0, %s102
      %s104 = sphi 0, %s102
      %s105 = sphi 0, %s104
      %s119 = sphi 0, %s105
      %s127 = sphi 0, %s129
      %s130 = sphi 0, %s127
      %s131 = sphi 0, %s130
      %s147 = sphi 0, %s131
    $region4: #{tpu_custom_call.1} parent=1 // loop_header_branch
      %18 = sbr.rel (%p16) target = $region8
    $region5: #{tpu_custom_call.1} parent=1 // loop_body
      %s20 = ssub.s32 %s15, 1
      %s21 = ssub.s32 %s15, 2
      %s31 = sadd.s32 1, %s24
      %p32 = scmp.ge.s32.totalorder %s31, 1
      %s33 = scalar_select %p32, 0, %s31
      %s34 = sadd.s32 1, %s23
      %s35 = scalar_select %p32, %s34, %s23
      %p36 = scmp.ge.s32.totalorder %s35, 1
      %s37 = scalar_select %p36, 0, %s35
      %s38 = sadd.s32 1, %s22
      %s39 = scalar_select %p36, %s38, %s22
      %p40 = scmp.ge.s32.totalorder %s39, 2
      %s41 = scalar_select %p40, 0, %s39
      %s42 = sadd.s32 %s23, %s24
      %s43 = sadd.s32 %s37, %s33
      %s44 = ssub.s32 %s22, %s41
      %s45 = ssub.s32 %s42, %s43
      %s46 = sor.u32 %s44, %s45
      %p47 = scmp.eq.s32.totalorder %s46, 0
      %s49 = sadd.s32 %s48, 1
      %s50 = scalar_select %p47, %s48, %s49
      %p53 = pneg %p47
      %p54 = scmp.eq.s32.totalorder %s15, 1
      %p55 = por %p53, %p54
      %p56 = scmp.ne.s32.totalorder %s48, %s51
      %p57 = scmp.eq.s32.totalorder %s15, 0
      %p58 = por %p56, %p57
      %p59 = scmp.ne.s32.totalorder %s48, %s51
      %p60 = scmp.eq.s32.totalorder %s20, 1
      %p61 = por %p59, %p60
      %p62 = scmp.ne.s32.totalorder %s51, %s52
      %p63 = scmp.eq.s32.totalorder %s20, 0
      %p64 = por %p62, %p63
      %p65 = scmp.ne.s32.totalorder %s51, %s52
      %p66 = scmp.eq.s32.totalorder %s21, 1
      %p67 = por %p65, %p66
      %p69 = scmp.ne.s32.totalorder %s52, %s68
      %p70 = scmp.eq.s32.totalorder %s21, 0
      %p71 = por %p69, %p70
      %s72 = sadd.s32 %s23, %s24
      %s73 = sadd.s32 %s37, %s33
      %s74 = ssub.s32 %s22, %s41
      %s75 = ssub.s32 %s72, %s73
      %s76 = sor.u32 %s74, %s75
      %p77 = scmp.eq.s32.totalorder %s76, 0
      %s79 = sadd.s32 %s78, 1
      %s80 = scalar_select %p77, %s78, %s79
      %p83 = pneg %p77
      %p84 = scmp.eq.s32.totalorder %s15, 1
      %p85 = por %p83, %p84
      %p86 = scmp.ne.s32.totalorder %s78, %s81
      %p87 = scmp.eq.s32.totalorder %s15, 0
      %p88 = por %p86, %p87
      %p89 = scmp.ne.s32.totalorder %s78, %s81
      %p90 = scmp.eq.s32.totalorder %s20, 1
      %p91 = por %p89, %p90
      %p92 = scmp.ne.s32.totalorder %s81, %s82
      %p93 = scmp.eq.s32.totalorder %s20, 0
      %p94 = por %p92, %p93
      %p95 = scmp.ne.s32.totalorder %s81, %s82
      %p96 = scmp.eq.s32.totalorder %s21, 1
      %p97 = por %p95, %p96
      %p99 = scmp.ne.s32.totalorder %s82, %s98
      %p100 = scmp.eq.s32.totalorder %s21, 0
      %p101 = por %p99, %p100
      %s103 = sadd.s32 %s102, 1
      %p106 = scmp.eq.s32.totalorder %s15, 1
      %p107 = scmp.ne.s32.totalorder %s102, %s104
      %p108 = scmp.eq.s32.totalorder %s15, 0
      %p109 = por %p107, %p108
      %p110 = scmp.ne.s32.totalorder %s102, %s104
      %p111 = scmp.eq.s32.totalorder %s20, 1
      %p112 = por %p110, %p111
      %p113 = scmp.ne.s32.totalorder %s104, %s105
      %p114 = scmp.eq.s32.totalorder %s20, 0
      %p115 = por %p113, %p114
      %p116 = scmp.ne.s32.totalorder %s104, %s105
      %p117 = scmp.eq.s32.totalorder %s21, 1
      %p118 = por %p116, %p117
      %p120 = scmp.ne.s32.totalorder %s105, %s119
      %p121 = scmp.eq.s32.totalorder %s21, 0
      %p122 = por %p120, %p121
      %s123 = ssub.s32 %s22, %s41
      %s124 = ssub.s32 %s23, %s37
      %s125 = sor.u32 %s123, %s124
      %p126 = scmp.eq.s32.totalorder %s125, 0
      %s128 = sadd.s32 %s127, 1
      %s129 = scalar_select %p126, %s127, %s128
      %p132 = pneg %p126
      %p133 = scmp.eq.s32.totalorder %s15, 1
      %p134 = por %p132, %p133
      %p135 = scmp.ne.s32.totalorder %s127, %s130
      %p136 = scmp.eq.s32.totalorder %s15, 0
      %p137 = por %p135, %p136
      %p138 = scmp.ne.s32.totalorder %s127, %s130
      %p139 = scmp.eq.s32.totalorder %s20, 1
      %p140 = por %p138, %p139
      %p141 = scmp.ne.s32.totalorder %s130, %s131
      %p142 = scmp.eq.s32.totalorder %s20, 0
      %p143 = por %p141, %p142
      %p144 = scmp.ne.s32.totalorder %s130, %s131
      %p145 = scmp.eq.s32.totalorder %s21, 1
      %p146 = por %p144, %p145
      %p148 = scmp.ne.s32.totalorder %s131, %s147
      %p149 = scmp.eq.s32.totalorder %s21, 0
      %p150 = por %p148, %p149
      %p151 = scmp.le.s32.totalorder 1, %s15
      %p152 = scmp.lt.s32.totalorder %s15, 3
      %p153 = pnand %p151, %p152
      %p154 = pneg %p153
      // Predicated region
      $region9: #{tpu_custom_call.1} parent=5 // pred_check
        _
      $region10: #{tpu_custom_call.1} parent=5 // pred_check_branch
        %156 = sbr.rel (%p153) target = $region12
      $region11: #{tpu_custom_call.1} parent=5 // pred_region
        %s157 = ssub.s32 %s15, 1
        // Predicated region
        $region13: #{tpu_custom_call.1} parent=11 // pred_check
          %p158 = pneg %p115
        $region14: #{tpu_custom_call.1} parent=11 // pred_check_branch
          %160 = sbr.rel (%p158) target = $region16
        $region15: #{tpu_custom_call.1} parent=11 // pred_region
          _
        $region16: #{tpu_custom_call.1} parent=11 // pred_fallthru
          _
      $region12: #{tpu_custom_call.1} parent=5 // pred_fallthru
        _
      %p161 = scmp.lt.s32.totalorder %s15, 2
      // Predicated region
      $region17: #{tpu_custom_call.1} parent=5 // pred_check
        %p162 = pneg %p161
      $region18: #{tpu_custom_call.1} parent=5 // pred_check_branch
        %164 = sbr.rel (%p162) target = $region20
      $region19: #{tpu_custom_call.1} parent=5 // pred_region
        // Predicated region
        $region21: #{tpu_custom_call.1} parent=19 // pred_check
          %p165 = pneg %p58
        $region22: #{tpu_custom_call.1} parent=19 // pred_check_branch
          %167 = sbr.rel (%p165) target = $region24
        $region23: #{tpu_custom_call.1} parent=19 // pred_region
          %s168 = sand.u32 %s48, 1
          %s169 = scalar_lea.sflag [#allocation3], %s168
          %s170 = sand.u32 %s48, 1
          %s171 = smul.addr %s170, 8
          %s172 = scalar_lea.vmem [#allocation2], %s171
          %s173 = sadd.s32 %s23, %s24
          %s174 = smul.u32 2, %s173
          %176 = vsyncadd %s169, 0
          %s177 = smul.addr %s22, 2
          %s178 = sadd.s32 %s174, %s177
          %s179 = smul.addr %s178, 4
          %s180 = scalar_lea.hbm %s0, %s179
          %s182 = sshll.u32 %s180, 4
          %s183 = int_to_ptr.hbm [resolvable:$true] %s182
          %s184 = sshll.u32 %s172, 4
          %s185 = int_to_ptr.vmem [resolvable:$true] %s184
          %187 = dma.hbm_to_vmem [thread:$0]  %s183, 128, %s185, %s169
        $region24: #{tpu_custom_call.1} parent=19 // pred_fallthru
          _
        // Predicated region
        $region25: #{tpu_custom_call.1} parent=19 // pred_check
          %p188 = pneg %p88
        $region26: #{tpu_custom_call.1} parent=19 // pred_check_branch
          %190 = sbr.rel (%p188) target = $region28
        $region27: #{tpu_custom_call.1} parent=19 // pred_region
          %s191 = sand.u32 %s78, 1
          %s192 = scalar_lea.sflag [#allocation5], %s191
          %s193 = sand.u32 %s78, 1
          %s194 = smul.addr %s193, 8
          %s195 = scalar_lea.vmem [#allocation4], %s194
          %s196 = sadd.s32 %s23, %s24
          %s197 = smul.u32 2, %s196
          %199 = vsyncadd %s192, 0
          %s200 = smul.addr %s22, 2
          %s201 = sadd.s32 %s197, %s200
          %s202 = smul.addr %s201, 4
          %s203 = scalar_lea.hbm %s1, %s202
          %s205 = sshll.u32 %s203, 4
          %s206 = int_to_ptr.hbm [resolvable:$true] %s205
          %s207 = sshll.u32 %s195, 4
          %s208 = int_to_ptr.vmem [resolvable:$true] %s207
          %210 = dma.hbm_to_vmem [thread:$0]  %s206, 128, %s208, %s192
        $region28: #{tpu_custom_call.1} parent=19 // pred_fallthru
          _
      $region20: #{tpu_custom_call.1} parent=5 // pred_fallthru
        _
      %p211 = scmp.le.s32.totalorder 1, %s15
      %p212 = scmp.lt.s32.totalorder %s15, 3
      %p213 = pnand %p211, %p212
      %p214 = pneg %p213
      // Predicated region
      $region29: #{tpu_custom_call.1} parent=5 // pred_check
        _
      $region30: #{tpu_custom_call.1} parent=5 // pred_check_branch
        %216 = sbr.rel (%p213) target = $region32
      $region31: #{tpu_custom_call.1} parent=5 // pred_region
        %s217 = ssub.s32 %s15, 1
        %s218 = sand.u32 %s51, 1
        %s219 = scalar_lea.sflag [#allocation3], %s218
        %s220 = sand.u32 %s51, 1
        %s221 = smul.addr %s220, 8
        %s222 = scalar_lea.vmem [#allocation2], %s221
        // Predicated region
        $region33: #{tpu_custom_call.1} parent=31 // pred_check
          %p223 = pneg %p64
        $region34: #{tpu_custom_call.1} parent=31 // pred_check_branch
          %225 = sbr.rel (%p223) target = $region36
        $region35: #{tpu_custom_call.1} parent=31 // pred_region
          %227 = dma.done %s219, 128
        $region36: #{tpu_custom_call.1} parent=31 // pred_fallthru
          _
        %s228 = sand.u32 %s81, 1
        %s229 = scalar_lea.sflag [#allocation5], %s228
        %s230 = sand.u32 %s81, 1
        %s231 = smul.addr %s230, 8
        %s232 = scalar_lea.vmem [#allocation4], %s231
        // Predicated region
        $region37: #{tpu_custom_call.1} parent=31 // pred_check
          %p233 = pneg %p94
        $region38: #{tpu_custom_call.1} parent=31 // pred_check_branch
          %235 = sbr.rel (%p233) target = $region40
        $region39: #{tpu_custom_call.1} parent=31 // pred_region
          %237 = dma.done %s229, 128
        $region40: #{tpu_custom_call.1} parent=31 // pred_fallthru
          _
        %s238 = sand.u32 %s51, 1
        %s239 = scalar_lea.sflag [#allocation3], %s238
        %s240 = sand.u32 %s51, 1
        %s241 = smul.addr %s240, 8
        %s242 = scalar_lea.vmem [#allocation2], %s241
        %p243 = pneg %p64
        %p244 = pneg %p61
        %s245 = sand.u32 %s81, 1
        %s246 = scalar_lea.sflag [#allocation5], %s245
        %s247 = sand.u32 %s81, 1
        %s248 = smul.addr %s247, 8
        %s249 = scalar_lea.vmem [#allocation4], %s248
        %p250 = pneg %p94
        %p251 = pneg %p91
        %p252 = pneg %p115
        %p253 = pneg %p112
        %p254 = pneg %p143
        %p255 = pneg %p140
        %p256 = scmp.lt.s32.totalorder %s25, 1
        %s257 = scalar_select %p256, %s25, 1
        %p258 = scmp.lt.s32.totalorder %s26, 0
        %s259 = scalar_select %p258, %s26, 0
        %s260 = sadd.s32 %s259, %s257
        %s261 = scalar_lea.vmem %s3, %s260
        %s262 = sadd.s32 %s26, %s27
        %s263 = smul.u32 2, %s262
        %s264 = sadd.s32 %s26, %s27
        %s265 = smul.u32 2, %s264
        %p266 = scmp.lt.s32.totalorder %s25, 1
        %s267 = scalar_select %p266, %s25, 1
        %p268 = scmp.lt.s32.totalorder %s26, 0
        %s269 = scalar_select %p268, %s26, 0
        %s270 = sadd.s32 %s269, %s267
        %s271 = scalar_lea.vmem %s3, %s270
        %p272 = scmp.eq.s32.totalorder %s27, 0
        // Predicated region
        $region41: #{tpu_custom_call.1} parent=31 // pred_check
          %p273 = pneg %p272
        $region42: #{tpu_custom_call.1} parent=31 // pred_check_branch
          %275 = sbr.rel (%p273) target = $region44
        $region43: #{tpu_custom_call.1} parent=31 // pred_region
          %vm276 = vcmask 0
          %277 = vst.msk [vmem:[%s271] sm:$0x1] %vm276, 0.0
        $region44: #{tpu_custom_call.1} parent=31 // pred_fallthru
          _
        %v278 = vld [vmem:[%s222] sm:$0xff]
        %v279 = vld [vmem:[%s232] sm:$0xff]
        %v280 = vld [vmem:[%s2] sm:$0xf]
        %v281 = vmul.f32 %v278, %v278
        %283 = vst [vmem:[#allocation1] ss:$2 sm:$0xff] %v281
        %v284 = vld.sshfl [vmem:[#allocation1] sm:$0xff pattern:$0x75316420]
        %v285 = vld.sshfl [vmem:[#allocation1 + $0x8] sm:$0xff pattern:$0x75316420]
        %vm288 = vcmask 1043456
        %v289 = vsel %vm288, %v284, 0.0
        %v290 = vrot.slane %v289, 4
        %v291 = vadd.f32 %v289, %v290
        %v292 = vrot.slane %v291, 2
        %v293 = vadd.f32 %v291, %v292
        %v294 = vrot.slane %v293, 1
        %v295 = vadd.f32 %v293, %v294
        %v296 = vsel %vm288, %v285, 0.0
        %v297 = vrot.slane %v296, 4
        %v298 = vadd.f32 %v296, %v297
        %v299 = vrot.slane %v298, 2
        %v300 = vadd.f32 %v298, %v299
        %v301 = vrot.slane %v300, 1
        %v302 = vadd.f32 %v300, %v301
        %v303 = vrsqrt.pop %v295
        %v304 = vmul.f32 %v303, %v295
        %v305 = vmul.f32 %v304, %v303
        %v306 = vmul.f32 0.5, %v305
        %v307 = vsub.f32 1.5, %v306
        %v308 = vmul.f32 %v303, %v307
        %v309 = vmul.f32 %v295, %v308
        %vm310 = vcmp.eq.f32.partialorder %v295, inf
        %v311 = vsel %vm310, %v295, %v309
        %vm312 = vcmp.eq.f32.partialorder %v295, 0.0
        %v313 = vand.u32 %v295, 2147483648
        %v314 = vsel %vm312, %v313, %v311
        %v315 = vrsqrt.pop %v302
        %v316 = vmul.f32 %v315, %v302
        %v317 = vmul.f32 %v316, %v315
        %v318 = vmul.f32 0.5, %v317
        %v319 = vsub.f32 1.5, %v318
        %v320 = vmul.f32 %v315, %v319
        %v321 = vmul.f32 %v302, %v320
        %vm322 = vcmp.eq.f32.partialorder %v302, inf
        %v323 = vsel %vm322, %v302, %v321
        %vm324 = vcmp.eq.f32.partialorder %v302, 0.0
        %v325 = vand.u32 %v302, 2147483648
        %v326 = vsel %vm324, %v325, %v323
        %v327 = vadd.f32 %v314, 1e-10
        %v328 = vadd.f32 %v326, 1e-10
        %v329 = vrcp.pop %v327
        %v330 = vmul.f32 %v327, %v329
        %v331 = vsub.f32 1.0, %v330
        %v332 = vmul.f32 %v329, %v331
        %v333 = vadd.f32 %v329, %v332
        %vm334 = vweird.f32 %v327
        %vm335 = vweird.f32 %v329
        %vm336 = vmor %vm334, %vm335
        %v337 = vsel %vm336, %v329, %v333
        %v338 = vand.u32 2147483647, %v327
        %vm339 = vcmp.eq.f32.partialorder %v338, 8.507059e+37
        %v340 = vand.u32 %v327, 2147483648
        %v341 = vor.u32 1.1754944e-38, %v340
        %v342 = vsel %vm339, %v341, %v337
        %v343 = vmul.f32 1.0, %v342
        %v344 = vrcp.pop %v328
        %v345 = vmul.f32 %v328, %v344
        %v346 = vsub.f32 1.0, %v345
        %v347 = vmul.f32 %v344, %v346
        %v348 = vadd.f32 %v344, %v347
        %vm349 = vweird.f32 %v328
        %vm350 = vweird.f32 %v344
        %vm351 = vmor %vm349, %vm350
        %v352 = vsel %vm351, %v344, %v348
        %v353 = vand.u32 2147483647, %v328
        %vm354 = vcmp.eq.f32.partialorder %v353, 8.507059e+37
        %v355 = vand.u32 %v328, 2147483648
        %v356 = vor.u32 1.1754944e-38, %v355
        %v357 = vsel %vm354, %v356, %v352
        %v358 = vmul.f32 1.0, %v357
        %v359 = vmul.f32 %v279, %v279
        %361 = vst [vmem:[#allocation1] ss:$2 sm:$0xff] %v359
        %v362 = vld.sshfl [vmem:[#allocation1] sm:$0xff pattern:$0x75316420]
        %v363 = vld.sshfl [vmem:[#allocation1 + $0x8] sm:$0xff pattern:$0x75316420]
        %v366 = vsel %vm288, %v362, 0.0
        %v367 = vrot.slane %v366, 4
        %v368 = vadd.f32 %v366, %v367
        %v369 = vrot.slane %v368, 2
        %v370 = vadd.f32 %v368, %v369
        %v371 = vrot.slane %v370, 1
        %v372 = vadd.f32 %v370, %v371
        %v373 = vsel %vm288, %v363, 0.0
        %v374 = vrot.slane %v373, 4
        %v375 = vadd.f32 %v373, %v374
        %v376 = vrot.slane %v375, 2
        %v377 = vadd.f32 %v375, %v376
        %v378 = vrot.slane %v377, 1
        %v379 = vadd.f32 %v377, %v378
        %v380 = vrsqrt.pop %v372
        %v381 = vmul.f32 %v380, %v372
        %v382 = vmul.f32 %v381, %v380
        %v383 = vmul.f32 0.5, %v382
        %v384 = vsub.f32 1.5, %v383
        %v385 = vmul.f32 %v380, %v384
        %v386 = vmul.f32 %v372, %v385
        %vm387 = vcmp.eq.f32.partialorder %v372, inf
        %v388 = vsel %vm387, %v372, %v386
        %vm389 = vcmp.eq.f32.partialorder %v372, 0.0
        %v390 = vand.u32 %v372, 2147483648
        %v391 = vsel %vm389, %v390, %v388
        %v392 = vrsqrt.pop %v379
        %v393 = vmul.f32 %v392, %v379
        %v394 = vmul.f32 %v393, %v392
        %v395 = vmul.f32 0.5, %v394
        %v396 = vsub.f32 1.5, %v395
        %v397 = vmul.f32 %v392, %v396
        %v398 = vmul.f32 %v379, %v397
        %vm399 = vcmp.eq.f32.partialorder %v379, inf
        %v400 = vsel %vm399, %v379, %v398
        %vm401 = vcmp.eq.f32.partialorder %v379, 0.0
        %v402 = vand.u32 %v379, 2147483648
        %v403 = vsel %vm401, %v402, %v400
        %v404 = vadd.f32 %v391, 1e-10
        %v405 = vadd.f32 %v403, 1e-10
        %v406 = vrcp.pop %v404
        %v407 = vmul.f32 %v404, %v406
        %v408 = vsub.f32 1.0, %v407
        %v409 = vmul.f32 %v406, %v408
        %v410 = vadd.f32 %v406, %v409
        %vm411 = vweird.f32 %v404
        %vm412 = vweird.f32 %v406
        %vm413 = vmor %vm411, %vm412
        %v414 = vsel %vm413, %v406, %v410
        %v415 = vand.u32 2147483647, %v404
        %vm416 = vcmp.eq.f32.partialorder %v415, 8.507059e+37
        %v417 = vand.u32 %v404, 2147483648
        %v418 = vor.u32 1.1754944e-38, %v417
        %v419 = vsel %vm416, %v418, %v414
        %v420 = vmul.f32 1.0, %v419
        %v421 = vrcp.pop %v405
        %v422 = vmul.f32 %v405, %v421
        %v423 = vsub.f32 1.0, %v422
        %v424 = vmul.f32 %v421, %v423
        %v425 = vadd.f32 %v421, %v424
        %vm426 = vweird.f32 %v405
        %vm427 = vweird.f32 %v421
        %vm428 = vmor %vm426, %vm427
        %v429 = vsel %vm428, %v421, %v425
        %v430 = vand.u32 2147483647, %v405
        %vm431 = vcmp.eq.f32.partialorder %v430, 8.507059e+37
        %v432 = vand.u32 %v405, 2147483648
        %v433 = vor.u32 1.1754944e-38, %v432
        %v434 = vsel %vm431, %v433, %v429
        %v435 = vmul.f32 1.0, %v434
        %v438 = vrot.slane %v358, 4
        %v439 = vsel %vm288, %v343, %v438
        %v441 = vmul.f32 %v278, %v439
        %v444 = vrot.slane %v435, 4
        %v445 = vsel %vm288, %v420, %v444
        %v447 = vmul.f32 %v279, %v445
        %v448 = vsub.f32 %v441, %v447
        %v449 = vmul.f32 %v448, %v448
        %451 = vst [vmem:[#allocation1] ss:$2 sm:$0xff] %v449
        %v452 = vld.sshfl [vmem:[#allocation1] sm:$0xff pattern:$0x75316420]
        %v453 = vld.sshfl [vmem:[#allocation1 + $0x8] sm:$0xff pattern:$0x75316420]
        %v456 = vsel %vm288, %v452, 0.0
        %v457 = vsel %vm288, %v453, 0.0
        %v458 = vadd.f32 %v456, %v457
        %459 = vadd.xlane.f32.xlu0 %v458
        %v460 = vpop.xlane.xlu0 %459
        %v461 = vld [vmem:[%s271] sm:$0x1]
        %v462 = vmul.f32 %v280, %v460
        %vm463 = vcmask 3072
        %v464 = vsel %vm463, %v462, 0.0
        %v465 = vrot.slane %v464, 4
        %v466 = vadd.f32 %v464, %v465
        %v467 = vrot.slane %v466, 2
        %v468 = vadd.f32 %v466, %v467
        %v469 = vrot.slane %v468, 1
        %v470 = vadd.f32 %v468, %v469
        %v471 = vadd.f32 %v461, %v470
        %vm472 = vcmask 0
        %473 = vst.msk [vmem:[%s271] sm:$0x1] %vm472, %v471
        %p474 = scmp.lt.s32.totalorder %s25, 1
        %s475 = scalar_select %p474, %s25, 1
        %p476 = scmp.lt.s32.totalorder %s26, 0
        %s477 = scalar_select %p476, %s26, 0
        %s478 = sadd.s32 %s477, %s475
        %s479 = scalar_lea.vmem %s3, %s478
        // Predicated region
        $region45: #{tpu_custom_call.1} parent=31 // pred_check
          %p480 = pneg %p140
        $region46: #{tpu_custom_call.1} parent=31 // pred_check_branch
          %482 = sbr.rel (%p480) target = $region48
        $region47: #{tpu_custom_call.1} parent=31 // pred_region
          _
        $region48: #{tpu_custom_call.1} parent=31 // pred_fallthru
          _
      $region32: #{tpu_custom_call.1} parent=5 // pred_fallthru
        _
      %p483 = scmp.le.s32.totalorder 2, %s15
      // Predicated region
      $region49: #{tpu_custom_call.1} parent=5 // pred_check
        %p484 = pneg %p483
      $region50: #{tpu_custom_call.1} parent=5 // pred_check_branch
        %486 = sbr.rel (%p484) target = $region52
      $region51: #{tpu_custom_call.1} parent=5 // pred_region
        %s487 = ssub.s32 %s15, 2
        // Predicated region
        $region53: #{tpu_custom_call.1} parent=51 // pred_check
          %p488 = pneg %p146
        $region54: #{tpu_custom_call.1} parent=51 // pred_check_branch
          %490 = sbr.rel (%p488) target = $region56
        $region55: #{tpu_custom_call.1} parent=51 // pred_region
          %p491 = scmp.lt.s32.totalorder %s28, 1
          %s492 = scalar_select %p491, %s28, 1
          %p493 = scmp.lt.s32.totalorder %s29, 0
          %s494 = scalar_select %p493, %s29, 0
          %s495 = sadd.s32 %s494, %s492
          %s496 = scalar_lea.vmem %s3, %s495
        $region56: #{tpu_custom_call.1} parent=51 // pred_fallthru
          _
      $region52: #{tpu_custom_call.1} parent=5 // pred_fallthru
        _
    $region6: #{tpu_custom_call.1} parent=1 // loop_footer
      %s19 = sadd.s32 1, %s15
    $region7: #{tpu_custom_call.1} parent=1 // loop_footer_branch
      %14 = sbr.rel target = $region3
    $region8: #{tpu_custom_call.1} parent=1 // loop_exit
      _
    %497 = vsyncpa [#allocation3], 1
    %s498 = scalar_lea.sflag [#allocation3], 1
    %499 = vsyncpa %s498, 1
    %500 = vsyncpa [#allocation5], 1
    %s501 = scalar_lea.sflag [#allocation5], 1
    %502 = vsyncpa %s501, 1

</llo_original>
